<compile_context>
chip_gen: v7x
topology: tpu7x:2x2x1
jax: 0.10.0
libtpu: 0.0.40
codegen_flags: <defaults>
</compile_context>

<pallas_src>
import functools

import jax
import jax.numpy as jnp
from jax.experimental import pallas as pl
from jax.experimental.pallas import tpu as pltpu

_SUBLANE = 8
_SMALL_BATCH = 256   # below this a single grid-less call wins (no grid overhead)


def _round_up(x: int, m: int) -> int:
    return (x + m - 1) // m * m


def _mlp_fused_kernel(x_ref, *refs, n_layers: int):
    """Whole MLP in one kernel body: chained MXU matmuls with fused ReLU.

    refs = (w0_ref, ..., w{L-1}_ref, o_ref).  Activations stay in vregs/VMEM
    between layers (never round-trip HBM).  bf16 operands, f32 accumulation.
    """
    w_refs = refs[:n_layers]
    o_ref = refs[n_layers]

    h = x_ref[...]                               # (tile_m, in_channels) bf16
    for li in range(n_layers):
        y = jnp.dot(h, w_refs[li][...], preferred_element_type=jnp.float32)
        if li < n_layers - 1:
            # Cast right after the ReLU so a spilled intermediate is bf16.
            h = jnp.maximum(y, 0.0).astype(jnp.bfloat16)
        else:
            h = y                                # last layer: no activation, f32
    o_ref[...] = h.astype(o_ref.dtype)


def _resident_weight_spec(shape):
    """Constant-index weight block (DMA'd once, VMEM-resident across M tiles).

    Buffered(1) drops the pointless second pipeline buffer; fall back cleanly
    if this BlockSpec has no pipeline_mode kwarg."""
    idx_map = lambda i: (0, 0)
    try:
        return pl.BlockSpec(shape, idx_map, pipeline_mode=pl.Buffered(1))
    except Exception:  # pragma: no cover - API without pipeline_mode/Buffered
        return pl.BlockSpec(shape, idx_map)


def _cost_and_vmem(m_rows, tile_m, k0, ws, out_channels):
    """Cost estimate (scheduler hint) + explicit VMEM budget for this call."""
    flops = 2 * m_rows * sum(int(w.shape[0]) * int(w.shape[1]) for w in ws)
    bytes_accessed = (m_rows * k0 * 2                                    # x (bf16)
                      + sum(int(w.size) * w.dtype.itemsize for w in ws)  # weights
                      + m_rows * out_channels * 4)                       # out (f32)
    cost = pl.CostEstimate(flops=flops, transcendentals=0,
                           bytes_accessed=bytes_accessed)

    w_bytes = sum(int(w.size) * w.dtype.itemsize for w in ws)
    widest = max(int(w.shape[1]) for w in ws)
    need = (w_bytes                                    # resident weights
            + 2 * tile_m * k0 * 2                      # double-buffered x tile
            + 2 * tile_m * out_channels * 4            # double-buffered out tile
            + 2 * tile_m * widest * 4)                 # widest f32 intermediate
    vmem_limit = int(min(100 * 1024 * 1024, max(32 * 1024 * 1024, 2 * need)))
    return cost, vmem_limit


def mlp_pallas(x: jax.Array, weights_bf16, out_channels: int, *, tile_m: int = 1024):
    """Fused MLP forward.

    x: (M, in_channels) float32/bfloat16.
    weights_bf16: list of (in_features, out_features) bf16 arrays.
    Returns (M, out_channels) float32.
    """
    M, K0 = x.shape
    n_layers = len(weights_bf16)
    ws = list(weights_bf16)
    assert int(ws[-1].shape[1]) == out_channels

    # bf16 activations entering the kernel: halves the x DMA bytes per tile.
    x = x.astype(jnp.bfloat16)
    kernel = functools.partial(_mlp_fused_kernel, n_layers=n_layers)

    if M <= _SMALL_BATCH:
        # Tiny batch: single grid-less invocation, everything resident in VMEM.
        cost, vmem_limit = _cost_and_vmem(M, M, K0, ws, out_channels)
        return pl.pallas_call(
            kernel,
            out_shape=jax.ShapeDtypeStruct((M, out_channels), jnp.float32),
            in_specs=[pl.BlockSpec(memory_space=pltpu.MemorySpace.VMEM)] * (1 + n_layers),
            out_specs=pl.BlockSpec(memory_space=pltpu.MemorySpace.VMEM),
            cost_estimate=cost,
            compiler_params=pltpu.CompilerParams(vmem_limit_bytes=vmem_limit),
        )(x, *ws)

    # Tiled path: big tile_m amortizes ~0.35us/step grid overhead, capped so
    # the grid always has >=2 steps (v7x: two TensorCores share the 'parallel'
    # M axis; one giant step would leave a core idle).
    tm = min(tile_m, _round_up(pl.cdiv(M, 2), _SUBLANE))
    tm = _round_up(max(tm, _SUBLANE), _SUBLANE)
    m_pad = _round_up(M, tm)
    x_in = jnp.pad(x, ((0, m_pad - M), (0, 0))) if m_pad != M else x

    in_specs = [pl.BlockSpec((tm, K0), lambda i: (i, 0))]
    in_specs += [_resident_weight_spec(w.shape) for w in ws]
    cost, vmem_limit = _cost_and_vmem(m_pad, tm, K0, ws, out_channels)

    out = pl.pallas_call(
        kernel,
        out_shape=jax.ShapeDtypeStruct((m_pad, out_channels), jnp.float32),
        grid=(m_pad // tm,),
        in_specs=in_specs,
        out_specs=pl.BlockSpec((tm, out_channels), lambda i: (i, 0)),
        cost_estimate=cost,
        compiler_params=pltpu.CompilerParams(
            # no-op on single-TC v5e/v6e; shards M across the two v7x TCs.
            dimension_semantics=("parallel",),
            vmem_limit_bytes=vmem_limit),
    )(x_in, *ws)
    return out if m_pad == M else out[:M]


def mlp_layer_dims(n_layers, in_channels, out_channels, l0_units,
                   units_grow_rate, grow_every_x_layer):
    """Reproduce the layer sizing logic of MLP.__init__."""
    dims = [(in_channels, l0_units)]
    n_units = l0_units
    in_units = out_units = n_units
    for layer in range(1, n_layers - 1):
        if layer % grow_every_x_layer == 0:
            out_units *= units_grow_rate
        dims.append((in_units, out_units))
        in_units = out_units
    dims.append((in_units, out_channels))
    return dims


def init_mlp_params(key, dims, dtype=jnp.float32):
    """PyTorch-style uniform(-1/sqrt(fan_in), +1/sqrt(fan_in)) init.

    Weights stored already transposed to (in_features, out_features)."""
    params = []
    for (fan_in, fan_out) in dims:
        key, sub = jax.random.split(key)
        bound = 1.0 / jnp.sqrt(jnp.asarray(fan_in, dtype))
        w_t = jax.random.uniform(
            sub, (fan_in, fan_out), dtype=dtype, minval=-bound, maxval=bound)
        params.append(w_t)
    return params


def mlp_forward_ref(x, weights):
    """Pure-JAX reference: relu on all layers but the last.  Given bf16
    weights it reproduces the kernel's exact dtype recipe (bf16 operands,
    f32 accumulation); given f32 weights it is a pure-f32 sanity reference."""
    h = x
    n = len(weights)
    for i, w in enumerate(weights):
        y = jnp.dot(h.astype(w.dtype), w, preferred_element_type=jnp.float32)
        h = jnp.maximum(y, 0.0) if i < n - 1 else y
    return h


if __name__ == "__main__":
    # Small, MLP-consistent configuration.
    n_layers = 4
    in_channels = 32
    out_channels = 16
    l0_units = 128
    units_grow_rate = 2
    grow_every_x_layer = 2
    batch = 8

    dims = mlp_layer_dims(n_layers, in_channels, out_channels, l0_units,
                          units_grow_rate, grow_every_x_layer)
    # dims == [(32,128), (128,128), (128,256), (256,16)]

    key = jax.random.PRNGKey(0)
    key, xkey = jax.random.split(key)
    x = jax.random.normal(xkey, (batch, in_channels), dtype=jnp.float32)
    weights_f32 = init_mlp_params(key, dims, dtype=jnp.float32)
    weights_bf16 = [w.astype(jnp.bfloat16) for w in weights_f32]

    # Small-batch (grid-less, fully fused) path.
    out = jax.block_until_ready(mlp_pallas(x, weights_bf16, out_channels))
    assert out.shape == (batch, out_channels)
    assert out.dtype == jnp.float32

    ref_bf16 = mlp_forward_ref(x, weights_bf16)   # same bf16-matmul recipe
    ref_f32 = mlp_forward_ref(x, weights_f32)     # pure f32 sanity check
    assert jnp.allclose(out, ref_bf16, atol=2e-2, rtol=2e-2)
    assert jnp.allclose(out, ref_f32, atol=1e-1, rtol=1e-1)

    # Batch-tiled ('parallel' M grid with >=2 steps) path.
    xb = jax.random.normal(jax.random.PRNGKey(1), (300, in_channels),
                           dtype=jnp.float32)
    outb = jax.block_until_ready(mlp_pallas(xb, weights_bf16, out_channels))
    refb = mlp_forward_ref(xb, weights_bf16)
    assert outb.shape == (300, out_channels)
    assert jnp.allclose(outb, refb, atol=2e-2, rtol=2e-2)

    print("KERNEL_OK")
</pallas_src>

<mosaic_0001>
module attributes {stable_mosaic.version = 11 : i64} {
  func.func @_mlp_fused_kernel(%arg0: memref<8x32xbf16, #tpu.memory_space<vmem>>, %arg1: memref<32x128xbf16, #tpu.memory_space<vmem>>, %arg2: memref<128x128xbf16, #tpu.memory_space<vmem>>, %arg3: memref<128x256xbf16, #tpu.memory_space<vmem>>, %arg4: memref<256x16xbf16, #tpu.memory_space<vmem>>, %arg5: memref<8x16xf32, #tpu.memory_space<vmem>>) attributes {dimension_semantics = [], scalar_prefetch = 0 : i64, scratch_operands = 0 : i64, tpu.core_type = #tpu.core_type<tc>} {
    %c0 = arith.constant 0 : index
    %c0_0 = arith.constant 0 : index
    %0 = vector.load %arg0[%c0, %c0_0] : memref<8x32xbf16, #tpu.memory_space<vmem>>, vector<8x32xbf16>
    %c0_1 = arith.constant 0 : index
    %c0_2 = arith.constant 0 : index
    %1 = vector.load %arg1[%c0_1, %c0_2] : memref<32x128xbf16, #tpu.memory_space<vmem>>, vector<32x128xbf16>
    %cst = arith.constant dense<0.000000e+00> : vector<8x128xf32>
    %2 = tpu.matmul %0, %1, %cst {dimension_numbers = #tpu.dot_dimension_numbers<[1], [0], [0], [1], [0, 0, 1, 1], [], []>} : vector<8x32xbf16>, vector<32x128xbf16>, vector<8x128xf32> -> vector<8x128xf32>
    %cst_3 = arith.constant 0.000000e+00 : f32
    %3 = vector.broadcast %cst_3 : f32 to vector<8x128xf32>
    %4 = arith.maximumf %2, %3 : vector<8x128xf32>
    %5 = arith.truncf %4 : vector<8x128xf32> to vector<8x128xbf16>
    %c0_4 = arith.constant 0 : index
    %c0_5 = arith.constant 0 : index
    %6 = vector.load %arg2[%c0_4, %c0_5] : memref<128x128xbf16, #tpu.memory_space<vmem>>, vector<128x128xbf16>
    %cst_6 = arith.constant dense<0.000000e+00> : vector<8x128xf32>
    %7 = tpu.matmul %5, %6, %cst_6 {dimension_numbers = #tpu.dot_dimension_numbers<[1], [0], [0], [1], [0, 0, 1, 1], [], []>} : vector<8x128xbf16>, vector<128x128xbf16>, vector<8x128xf32> -> vector<8x128xf32>
    %cst_7 = arith.constant 0.000000e+00 : f32
    %8 = vector.broadcast %cst_7 : f32 to vector<8x128xf32>
    %9 = arith.maximumf %7, %8 : vector<8x128xf32>
    %10 = arith.truncf %9 : vector<8x128xf32> to vector<8x128xbf16>
    %c0_8 = arith.constant 0 : index
    %c0_9 = arith.constant 0 : index
    %11 = vector.load %arg3[%c0_8, %c0_9] : memref<128x256xbf16, #tpu.memory_space<vmem>>, vector<128x256xbf16>
    %cst_10 = arith.constant dense<0.000000e+00> : vector<8x256xf32>
    %12 = tpu.matmul %10, %11, %cst_10 {dimension_numbers = #tpu.dot_dimension_numbers<[1], [0], [0], [1], [0, 0, 1, 1], [], []>} : vector<8x128xbf16>, vector<128x256xbf16>, vector<8x256xf32> -> vector<8x256xf32>
    %cst_11 = arith.constant 0.000000e+00 : f32
    %13 = vector.broadcast %cst_11 : f32 to vector<8x256xf32>
    %14 = arith.maximumf %12, %13 : vector<8x256xf32>
    %15 = arith.truncf %14 : vector<8x256xf32> to vector<8x256xbf16>
    %c0_12 = arith.constant 0 : index
    %c0_13 = arith.constant 0 : index
    %16 = vector.load %arg4[%c0_12, %c0_13] : memref<256x16xbf16, #tpu.memory_space<vmem>>, vector<256x16xbf16>
    %cst_14 = arith.constant dense<0.000000e+00> : vector<8x16xf32>
    %17 = tpu.matmul %15, %16, %cst_14 {dimension_numbers = #tpu.dot_dimension_numbers<[1], [0], [0], [1], [0, 0, 1, 1], [], []>} : vector<8x256xbf16>, vector<256x16xbf16>, vector<8x16xf32> -> vector<8x16xf32>
    %c0_15 = arith.constant 0 : index
    %c0_16 = arith.constant 0 : index
    %18 = vector.load %arg5[%c0_15, %c0_16] : memref<8x16xf32, #tpu.memory_space<vmem>>, vector<8x16xf32>
    tpu.vector_store %arg5[%c0_15, %c0_16], %17 {strides = array<i32>} : memref<8x16xf32, #tpu.memory_space<vmem>>, vector<8x16xf32>,
    return
  }
}

</mosaic_0001>

<llo_original>
// kernel: tpu_custom_call.1
$region0: #{tpu_custom_call.1}
  #allocation0 [shape = 'u32[]', space=smem, size = 0x4, offset = 0x4, fixed_abs, tag = 'smem constant byte address 0x4 - core index']
  #allocation1 [shape = 'u32[144,128]{1,0:T(1,128)}', space=vmem, size = 0x12000, scoped, tag = 'internal scratch']
  %s0 = inlined_call_operand.vmem [shape: bf16[8,32], index: 0, kind: input, shape index: {}]
  %s1 = inlined_call_operand.vmem [shape: bf16[32,128], index: 1, kind: input, shape index: {}]
  %s2 = inlined_call_operand.hbm [shape: bf16[128,128], index: 2, kind: input, shape index: {}]
  %s3 = inlined_call_operand.vmem [shape: bf16[128,256], index: 3, kind: input, shape index: {}]
  %s4 = inlined_call_operand.vmem [shape: bf16[256,16], index: 4, kind: input, shape index: {}]
  %s5 = inlined_call_operand.hbm [shape: f32[8,16], index: 5, kind: output, shape index: {}]
  %s6 = sld [smem:[#allocation0]]
  $region34: #{tpu_custom_call.1} parent=0
    _
  %s8 = ssub.s32 1, %s6
  %s9 = scalar_select 0, %s8, %s6
  $region1: #{tpu_custom_call.1} parent=0
    #allocation2 [shape = 'u8[32768]{0}', space=vmem, size = 0x8000, scoped, tag = 'input window, operand 2, single buffered']
    #allocation3 [shape = 's32[1]{0}', space=sflag, size = 0x4, scoped, tag = 'scoped memory for tpu_custom_call.1']
    #allocation4 [shape = 's32[1]{0}', space=sflag, size = 0x4, scoped, tag = 'scoped memory for tpu_custom_call.1']
    #allocation5 [shape = 'u8[4096]{0}', space=vmem, size = 0x1000, scoped, tag = 'output window, operand 0, single buffered']
    %10 = vsyncpa [#allocation3], 0
    %11 = vsyncpa [#allocation4], 0
    // Predicated region
    $region2: #{tpu_custom_call.1} parent=1 // pred_check
      _
    $region3: #{tpu_custom_call.1} parent=1 // pred_check_branch
      %13 = sbr.rel (0) target = $region5
    $region4: #{tpu_custom_call.1} parent=1 // pred_region
      _
    $region5: #{tpu_custom_call.1} parent=1 // pred_fallthru
      _
    // Predicated region
    $region6: #{tpu_custom_call.1} parent=1 // pred_check
      _
    $region7: #{tpu_custom_call.1} parent=1 // pred_check_branch
      %15 = sbr.rel (0) target = $region9
    $region8: #{tpu_custom_call.1} parent=1 // pred_region
      _
    $region9: #{tpu_custom_call.1} parent=1 // pred_fallthru
      _
    // Predicated region
    $region10: #{tpu_custom_call.1} parent=1 // pred_check
      _
    $region11: #{tpu_custom_call.1} parent=1 // pred_check_branch
      %17 = sbr.rel (0) target = $region13
    $region12: #{tpu_custom_call.1} parent=1 // pred_region
      %s19 = ssub.s32 1024, 1024
      %20 = vsyncadd [#allocation3], %s19
      %s21 = sshll.u32 [#allocation2], 4
      %s22 = int_to_ptr.vmem [resolvable:$true] %s21
      %27 = dma.hbm_to_vmem [thread:$0]  %s2, 1024, %s22, [#allocation3], 64, 64, 4
    $region13: #{tpu_custom_call.1} parent=1 // pred_fallthru
      _
    // Predicated region
    $region14: #{tpu_custom_call.1} parent=1 // pred_check
      _
    $region15: #{tpu_custom_call.1} parent=1 // pred_check_branch
      %29 = sbr.rel (0) target = $region17
    $region16: #{tpu_custom_call.1} parent=1 // pred_region
      _
    $region17: #{tpu_custom_call.1} parent=1 // pred_fallthru
      _
    // Predicated region
    $region18: #{tpu_custom_call.1} parent=1 // pred_check
      _
    $region19: #{tpu_custom_call.1} parent=1 // pred_check_branch
      %31 = sbr.rel (0) target = $region21
    $region20: #{tpu_custom_call.1} parent=1 // pred_region
      _
    $region21: #{tpu_custom_call.1} parent=1 // pred_fallthru
      _
    // Predicated region
    $region22: #{tpu_custom_call.1} parent=1 // pred_check
      _
    $region23: #{tpu_custom_call.1} parent=1 // pred_check_branch
      %33 = sbr.rel (0) target = $region25
    $region24: #{tpu_custom_call.1} parent=1 // pred_region
      %34 = dma.done [#allocation3], 1024
    $region25: #{tpu_custom_call.1} parent=1 // pred_fallthru
      _
    %v36 = vld [vmem:[%s0] sm:$0xf]
    %v37 = vld [vmem:[%s1] sm:$0xf]
    %v38 = vld [vmem:[%s1 + $0x4] sm:$0xf]
    %v39 = vld [vmem:[%s1 + $0x8] sm:$0xf]
    %v40 = vld [vmem:[%s1 + $0xc] sm:$0xf]
    %v45 = vunpack.c.l.b16 %v37
    %v46 = vunpack.c.l.b16 %v38
    %v47 = vunpack.c.l.b16 %v39
    %v48 = vunpack.c.l.b16 %v40
    %v49 = vpack.c.b16 %v46, %v45
    %v50 = vpack.c.b16 %v48, %v47
    %vm53 = vcmask 261120
    %v55 = vsel %vm53, %v36, 0
    %57 = vmatprep.subr.bf16.mxu0 0
    %58 = vmatpush1.bf16.msra.mxu0 %v49
    %59 = vmatprep.subr.bf16.mxu0 0
    %60 = vmatpush1.bf16.msra.mxu0 %v50
    %61 = vmatprep.subr.bf16.mxu0 0
    %62 = vmatpush1.bf16.msra.mxu0 0
    %63 = vmatprep.subr.bf16.mxu0 0
    %64 = vmatpush1.bf16.msra.mxu0 0
    %65 = vmatprep.subr.bf16.mxu0 0
    %66 = vmatpush1.bf16.msra.mxu0 0
    %67 = vmatprep.subr.bf16.mxu0 0
    %68 = vmatpush1.bf16.msra.mxu0 0
    %69 = vmatprep.subr.bf16.mxu0 0
    %70 = vmatpush1.bf16.msra.mxu0 0
    %71 = vmatprep.subr.bf16.mxu0 0
    %72 = vmatpush1.bf16.msra.mxu0 0
    %73 = vmatprep.subr.bf16.mxu0 0
    %74 = vmatpush1.bf16.msra.mxu0 0
    %75 = vmatprep.subr.bf16.mxu0 0
    %76 = vmatpush1.bf16.msra.mxu0 0
    %77 = vmatprep.subr.bf16.mxu0 0
    %78 = vmatpush1.bf16.msra.mxu0 0
    %79 = vmatprep.subr.bf16.mxu0 0
    %80 = vmatpush1.bf16.msra.mxu0 0
    %81 = vmatprep.subr.bf16.mxu0 0
    %82 = vmatpush1.bf16.msra.mxu0 0
    %83 = vmatprep.subr.bf16.mxu0 0
    %84 = vmatpush1.bf16.msra.mxu0 0
    %85 = vmatprep.subr.bf16.mxu0 0
    %86 = vmatpush1.bf16.msra.mxu0 0
    %87 = vmatprep.subr.bf16.mxu0 0
    %88 = vmatpush1.bf16.msra.mxu0 0
    %89 = vmatprep.mubr.bf16.mxu0 0
    %90 = vmatmul.mubr.bf16.gmra.mrb[0].mxu0 %v55
    %v91 = vpop.f32.mrb[0].mxu0
    %v92 = vadd.f32 0.0, %v91
    %v93 = vpop.f32.mrb[0].mxu0
    %v94 = vpop.f32.mrb[0].mxu0
    %v95 = vpop.f32.mrb[0].mxu0
    %96 = vdwg.mxu0
    %v97 = vmax.f32 %v92, 0.0
    %v98 = vpack.c.bf16 %v97, %v97
    %v99 = vld [vmem:[#allocation2] sm:$0xf]
    %v100 = vld [vmem:[#allocation2 + $0x4] sm:$0xf]
    %v101 = vld [vmem:[#allocation2 + $0x8] sm:$0xf]
    %v102 = vld [vmem:[#allocation2 + $0xc] sm:$0xf]
    %v103 = vld [vmem:[#allocation2 + $0x10] sm:$0xf]
    %v104 = vld [vmem:[#allocation2 + $0x14] sm:$0xf]
    %v105 = vld [vmem:[#allocation2 + $0x18] sm:$0xf]
    %v106 = vld [vmem:[#allocation2 + $0x1c] sm:$0xf]
    %v107 = vld [vmem:[#allocation2 + $0x20] sm:$0xf]
    %v108 = vld [vmem:[#allocation2 + $0x24] sm:$0xf]
    %v109 = vld [vmem:[#allocation2 + $0x28] sm:$0xf]
    %v110 = vld [vmem:[#allocation2 + $0x2c] sm:$0xf]
    %v111 = vld [vmem:[#allocation2 + $0x30] sm:$0xf]
    %v112 = vld [vmem:[#allocation2 + $0x34] sm:$0xf]
    %v113 = vld [vmem:[#allocation2 + $0x38] sm:$0xf]
    %v114 = vld [vmem:[#allocation2 + $0x3c] sm:$0xf]
    %v131 = vunpack.c.l.b16 %v99
    %v132 = vunpack.c.l.b16 %v100
    %v133 = vunpack.c.l.b16 %v101
    %v134 = vunpack.c.l.b16 %v102
    %v135 = vunpack.c.l.b16 %v103
    %v136 = vunpack.c.l.b16 %v104
    %v137 = vunpack.c.l.b16 %v105
    %v138 = vunpack.c.l.b16 %v106
    %v139 = vunpack.c.l.b16 %v107
    %v140 = vunpack.c.l.b16 %v108
    %v141 = vunpack.c.l.b16 %v109
    %v142 = vunpack.c.l.b16 %v110
    %v143 = vunpack.c.l.b16 %v111
    %v144 = vunpack.c.l.b16 %v112
    %v145 = vunpack.c.l.b16 %v113
    %v146 = vunpack.c.l.b16 %v114
    %v147 = vpack.c.b16 %v132, %v131
    %v148 = vpack.c.b16 %v134, %v133
    %v149 = vpack.c.b16 %v136, %v135
    %v150 = vpack.c.b16 %v138, %v137
    %v151 = vpack.c.b16 %v140, %v139
    %v152 = vpack.c.b16 %v142, %v141
    %v153 = vpack.c.b16 %v144, %v143
    %v154 = vpack.c.b16 %v146, %v145
    %163 = vmatprep.subr.bf16.mxu0 0
    %164 = vmatpush1.bf16.msra.mxu0 %v147
    %165 = vmatprep.subr.bf16.mxu0 0
    %166 = vmatpush1.bf16.msra.mxu0 %v148
    %167 = vmatprep.subr.bf16.mxu0 0
    %168 = vmatpush1.bf16.msra.mxu0 %v149
    %169 = vmatprep.subr.bf16.mxu0 0
    %170 = vmatpush1.bf16.msra.mxu0 %v150
    %171 = vmatprep.subr.bf16.mxu0 0
    %172 = vmatpush1.bf16.msra.mxu0 %v151
    %173 = vmatprep.subr.bf16.mxu0 0
    %174 = vmatpush1.bf16.msra.mxu0 %v152
    %175 = vmatprep.subr.bf16.mxu0 0
    %176 = vmatpush1.bf16.msra.mxu0 %v153
    %177 = vmatprep.subr.bf16.mxu0 0
    %178 = vmatpush1.bf16.msra.mxu0 %v154
    %179 = vmatprep.subr.bf16.mxu0 0
    %180 = vmatpush1.bf16.msra.mxu0 0
    %181 = vmatprep.subr.bf16.mxu0 0
    %182 = vmatpush1.bf16.msra.mxu0 0
    %183 = vmatprep.subr.bf16.mxu0 0
    %184 = vmatpush1.bf16.msra.mxu0 0
    %185 = vmatprep.subr.bf16.mxu0 0
    %186 = vmatpush1.bf16.msra.mxu0 0
    %187 = vmatprep.subr.bf16.mxu0 0
    %188 = vmatpush1.bf16.msra.mxu0 0
    %189 = vmatprep.subr.bf16.mxu0 0
    %190 = vmatpush1.bf16.msra.mxu0 0
    %191 = vmatprep.subr.bf16.mxu0 0
    %192 = vmatpush1.bf16.msra.mxu0 0
    %193 = vmatprep.subr.bf16.mxu0 0
    %194 = vmatpush1.bf16.msra.mxu0 0
    %195 = vmatprep.mubr.bf16.mxu0 0
    %196 = vmatmul.mubr.bf16.gmra.mrb[0].mxu0 %v98
    %v197 = vpop.f32.mrb[0].mxu0
    %v198 = vadd.f32 0.0, %v197
    %v199 = vpop.f32.mrb[0].mxu0
    %v200 = vpop.f32.mrb[0].mxu0
    %v201 = vpop.f32.mrb[0].mxu0
    %202 = vdwg.mxu0
    %v203 = vmax.f32 %v198, 0.0
    %v204 = vpack.c.bf16 %v203, %v203
    %v205 = vld [vmem:[%s3] sm:$0xff]
    %v206 = vld [vmem:[%s3 + $0x8] sm:$0xff]
    %v207 = vld [vmem:[%s3 + $0x10] sm:$0xff]
    %v208 = vld [vmem:[%s3 + $0x18] sm:$0xff]
    %v209 = vld [vmem:[%s3 + $0x20] sm:$0xff]
    %v210 = vld [vmem:[%s3 + $0x28] sm:$0xff]
    %v211 = vld [vmem:[%s3 + $0x30] sm:$0xff]
    %v212 = vld [vmem:[%s3 + $0x38] sm:$0xff]
    %v213 = vld [vmem:[%s3 + $0x40] sm:$0xff]
    %v214 = vld [vmem:[%s3 + $0x48] sm:$0xff]
    %v215 = vld [vmem:[%s3 + $0x50] sm:$0xff]
    %v216 = vld [vmem:[%s3 + $0x58] sm:$0xff]
    %v217 = vld [vmem:[%s3 + $0x60] sm:$0xff]
    %v218 = vld [vmem:[%s3 + $0x68] sm:$0xff]
    %v219 = vld [vmem:[%s3 + $0x70] sm:$0xff]
    %v220 = vld [vmem:[%s3 + $0x78] sm:$0xff]
    %v237 = vunpack.c.l.b16 %v205
    %v238 = vunpack.c.h.b16 %v205
    %v239 = vunpack.c.l.b16 %v206
    %v240 = vunpack.c.h.b16 %v206
    %v241 = vunpack.c.l.b16 %v207
    %v242 = vunpack.c.h.b16 %v207
    %v243 = vunpack.c.l.b16 %v208
    %v244 = vunpack.c.h.b16 %v208
    %v245 = vunpack.c.l.b16 %v209
    %v246 = vunpack.c.h.b16 %v209
    %v247 = vunpack.c.l.b16 %v210
    %v248 = vunpack.c.h.b16 %v210
    %v249 = vunpack.c.l.b16 %v211
    %v250 = vunpack.c.h.b16 %v211
    %v251 = vunpack.c.l.b16 %v212
    %v252 = vunpack.c.h.b16 %v212
    %v253 = vunpack.c.l.b16 %v213
    %v254 = vunpack.c.h.b16 %v213
    %v255 = vunpack.c.l.b16 %v214
    %v256 = vunpack.c.h.b16 %v214
    %v257 = vunpack.c.l.b16 %v215
    %v258 = vunpack.c.h.b16 %v215
    %v259 = vunpack.c.l.b16 %v216
    %v260 = vunpack.c.h.b16 %v216
    %v261 = vunpack.c.l.b16 %v217
    %v262 = vunpack.c.h.b16 %v217
    %v263 = vunpack.c.l.b16 %v218
    %v264 = vunpack.c.h.b16 %v218
    %v265 = vunpack.c.l.b16 %v219
    %v266 = vunpack.c.h.b16 %v219
    %v267 = vunpack.c.l.b16 %v220
    %v268 = vunpack.c.h.b16 %v220
    %v269 = vpack.c.b16 %v239, %v237
    %v270 = vpack.c.b16 %v240, %v238
    %v271 = vpack.c.b16 %v243, %v241
    %v272 = vpack.c.b16 %v244, %v242
    %v273 = vpack.c.b16 %v247, %v245
    %v274 = vpack.c.b16 %v248, %v246
    %v275 = vpack.c.b16 %v251, %v249
    %v276 = vpack.c.b16 %v252, %v250
    %v277 = vpack.c.b16 %v255, %v253
    %v278 = vpack.c.b16 %v256, %v254
    %v279 = vpack.c.b16 %v259, %v257
    %v280 = vpack.c.b16 %v260, %v258
    %v281 = vpack.c.b16 %v263, %v261
    %v282 = vpack.c.b16 %v264, %v262
    %v283 = vpack.c.b16 %v267, %v265
    %v284 = vpack.c.b16 %v268, %v266
    %301 = vmatprep.subr.bf16.mxu0 %v270
    %302 = vmatpush1.bf16.msra.mxu0 %v269
    %303 = vmatprep.subr.bf16.mxu0 %v272
    %304 = vmatpush1.bf16.msra.mxu0 %v271
    %305 = vmatprep.subr.bf16.mxu0 %v274
    %306 = vmatpush1.bf16.msra.mxu0 %v273
    %307 = vmatprep.subr.bf16.mxu0 %v276
    %308 = vmatpush1.bf16.msra.mxu0 %v275
    %309 = vmatprep.subr.bf16.mxu0 %v278
    %310 = vmatpush1.bf16.msra.mxu0 %v277
    %311 = vmatprep.subr.bf16.mxu0 %v280
    %312 = vmatpush1.bf16.msra.mxu0 %v279
    %313 = vmatprep.subr.bf16.mxu0 %v282
    %314 = vmatpush1.bf16.msra.mxu0 %v281
    %315 = vmatprep.subr.bf16.mxu0 %v284
    %316 = vmatpush1.bf16.msra.mxu0 %v283
    %317 = vmatprep.subr.bf16.mxu0 0
    %318 = vmatpush1.bf16.msra.mxu0 0
    %319 = vmatprep.subr.bf16.mxu0 0
    %320 = vmatpush1.bf16.msra.mxu0 0
    %321 = vmatprep.subr.bf16.mxu0 0
    %322 = vmatpush1.bf16.msra.mxu0 0
    %323 = vmatprep.subr.bf16.mxu0 0
    %324 = vmatpush1.bf16.msra.mxu0 0
    %325 = vmatprep.subr.bf16.mxu0 0
    %326 = vmatpush1.bf16.msra.mxu0 0
    %327 = vmatprep.subr.bf16.mxu0 0
    %328 = vmatpush1.bf16.msra.mxu0 0
    %329 = vmatprep.subr.bf16.mxu0 0
    %330 = vmatpush1.bf16.msra.mxu0 0
    %331 = vmatprep.subr.bf16.mxu0 0
    %332 = vmatpush1.bf16.msra.mxu0 0
    %333 = vmatprep.mubr.bf16.mxu0 0
    %334 = vmatmul.mubr.bf16.gmra.mrb[0].mxu0 %v204
    %v335 = vpop.f32.mrb[0].mxu0
    %v336 = vadd.f32 0.0, %v335
    %v337 = vpop.f32.mrb[0].mxu0
    %v338 = vadd.f32 0.0, %v337
    %v339 = vpop.f32.mrb[0].mxu0
    %v340 = vpop.f32.mrb[0].mxu0
    %341 = vdwg.mxu0
    %v342 = vmax.f32 %v336, 0.0
    %v343 = vmax.f32 %v338, 0.0
    %v344 = vpack.c.bf16 %v342, %v342
    %v345 = vpack.c.bf16 %v343, %v343
    %v346 = vld [vmem:[%s4] sm:$0xf]
    %v347 = vld [vmem:[%s4 + $0x4] sm:$0xf]
    %v348 = vld [vmem:[%s4 + $0x8] sm:$0xf]
    %v349 = vld [vmem:[%s4 + $0xc] sm:$0xf]
    %v350 = vld [vmem:[%s4 + $0x10] sm:$0xf]
    %v351 = vld [vmem:[%s4 + $0x14] sm:$0xf]
    %v352 = vld [vmem:[%s4 + $0x18] sm:$0xf]
    %v353 = vld [vmem:[%s4 + $0x1c] sm:$0xf]
    %v354 = vld [vmem:[%s4 + $0x20] sm:$0xf]
    %v355 = vld [vmem:[%s4 + $0x24] sm:$0xf]
    %v356 = vld [vmem:[%s4 + $0x28] sm:$0xf]
    %v357 = vld [vmem:[%s4 + $0x2c] sm:$0xf]
    %v358 = vld [vmem:[%s4 + $0x30] sm:$0xf]
    %v359 = vld [vmem:[%s4 + $0x34] sm:$0xf]
    %v360 = vld [vmem:[%s4 + $0x38] sm:$0xf]
    %v361 = vld [vmem:[%s4 + $0x3c] sm:$0xf]
    %v362 = vld [vmem:[%s4 + $0x40] sm:$0xf]
    %v363 = vld [vmem:[%s4 + $0x44] sm:$0xf]
    %v364 = vld [vmem:[%s4 + $0x48] sm:$0xf]
    %v365 = vld [vmem:[%s4 + $0x4c] sm:$0xf]
    %v366 = vld [vmem:[%s4 + $0x50] sm:$0xf]
    %v367 = vld [vmem:[%s4 + $0x54] sm:$0xf]
    %v368 = vld [vmem:[%s4 + $0x58] sm:$0xf]
    %v369 = vld [vmem:[%s4 + $0x5c] sm:$0xf]
    %v370 = vld [vmem:[%s4 + $0x60] sm:$0xf]
    %v371 = vld [vmem:[%s4 + $0x64] sm:$0xf]
    %v372 = vld [vmem:[%s4 + $0x68] sm:$0xf]
    %v373 = vld [vmem:[%s4 + $0x6c] sm:$0xf]
    %v374 = vld [vmem:[%s4 + $0x70] sm:$0xf]
    %v375 = vld [vmem:[%s4 + $0x74] sm:$0xf]
    %v376 = vld [vmem:[%s4 + $0x78] sm:$0xf]
    %v377 = vld [vmem:[%s4 + $0x7c] sm:$0xf]
    %v410 = vunpack.c.l.b16 %v346
    %v411 = vunpack.c.l.b16 %v347
    %v412 = vunpack.c.l.b16 %v348
    %v413 = vunpack.c.l.b16 %v349
    %v414 = vunpack.c.l.b16 %v350
    %v415 = vunpack.c.l.b16 %v351
    %v416 = vunpack.c.l.b16 %v352
    %v417 = vunpack.c.l.b16 %v353
    %v418 = vunpack.c.l.b16 %v354
    %v419 = vunpack.c.l.b16 %v355
    %v420 = vunpack.c.l.b16 %v356
    %v421 = vunpack.c.l.b16 %v357
    %v422 = vunpack.c.l.b16 %v358
    %v423 = vunpack.c.l.b16 %v359
    %v424 = vunpack.c.l.b16 %v360
    %v425 = vunpack.c.l.b16 %v361
    %v426 = vunpack.c.l.b16 %v362
    %v427 = vunpack.c.l.b16 %v363
    %v428 = vunpack.c.l.b16 %v364
    %v429 = vunpack.c.l.b16 %v365
    %v430 = vunpack.c.l.b16 %v366
    %v431 = vunpack.c.l.b16 %v367
    %v432 = vunpack.c.l.b16 %v368
    %v433 = vunpack.c.l.b16 %v369
    %v434 = vunpack.c.l.b16 %v370
    %v435 = vunpack.c.l.b16 %v371
    %v436 = vunpack.c.l.b16 %v372
    %v437 = vunpack.c.l.b16 %v373
    %v438 = vunpack.c.l.b16 %v374
    %v439 = vunpack.c.l.b16 %v375
    %v440 = vunpack.c.l.b16 %v376
    %v441 = vunpack.c.l.b16 %v377
    %v442 = vpack.c.b16 %v411, %v410
    %v443 = vpack.c.b16 %v413, %v412
    %v444 = vpack.c.b16 %v415, %v414
    %v445 = vpack.c.b16 %v417, %v416
    %v446 = vpack.c.b16 %v419, %v418
    %v447 = vpack.c.b16 %v421, %v420
    %v448 = vpack.c.b16 %v423, %v422
    %v449 = vpack.c.b16 %v425, %v424
    %v450 = vpack.c.b16 %v427, %v426
    %v451 = vpack.c.b16 %v429, %v428
    %v452 = vpack.c.b16 %v431, %v430
    %v453 = vpack.c.b16 %v433, %v432
    %v454 = vpack.c.b16 %v435, %v434
    %v455 = vpack.c.b16 %v437, %v436
    %v456 = vpack.c.b16 %v439, %v438
    %v457 = vpack.c.b16 %v441, %v440
    %474 = vmatprep.subr.bf16.mxu0 0
    %475 = vmatpush1.bf16.msra.mxu0 %v442
    %476 = vmatprep.subr.bf16.mxu0 0
    %477 = vmatpush1.bf16.msra.mxu0 %v443
    %478 = vmatprep.subr.bf16.mxu0 0
    %479 = vmatpush1.bf16.msra.mxu0 %v444
    %480 = vmatprep.subr.bf16.mxu0 0
    %481 = vmatpush1.bf16.msra.mxu0 %v445
    %482 = vmatprep.subr.bf16.mxu0 0
    %483 = vmatpush1.bf16.msra.mxu0 %v446
    %484 = vmatprep.subr.bf16.mxu0 0
    %485 = vmatpush1.bf16.msra.mxu0 %v447
    %486 = vmatprep.subr.bf16.mxu0 0
    %487 = vmatpush1.bf16.msra.mxu0 %v448
    %488 = vmatprep.subr.bf16.mxu0 0
    %489 = vmatpush1.bf16.msra.mxu0 %v449
    %490 = vmatprep.subr.bf16.mxu0 0
    %491 = vmatpush1.bf16.msra.mxu0 %v450
    %492 = vmatprep.subr.bf16.mxu0 0
    %493 = vmatpush1.bf16.msra.mxu0 %v451
    %494 = vmatprep.subr.bf16.mxu0 0
    %495 = vmatpush1.bf16.msra.mxu0 %v452
    %496 = vmatprep.subr.bf16.mxu0 0
    %497 = vmatpush1.bf16.msra.mxu0 %v453
    %498 = vmatprep.subr.bf16.mxu0 0
    %499 = vmatpush1.bf16.msra.mxu0 %v454
    %500 = vmatprep.subr.bf16.mxu0 0
    %501 = vmatpush1.bf16.msra.mxu0 %v455
    %502 = vmatprep.subr.bf16.mxu0 0
    %503 = vmatpush1.bf16.msra.mxu0 %v456
    %504 = vmatprep.subr.bf16.mxu0 0
    %505 = vmatpush1.bf16.msra.mxu0 %v457
    %506 = vmatprep.mubr.bf16.mxu0 %v345
    %507 = vmatmul.mubr.bf16.gmra.mrb[0].mxu0 %v344
    %v508 = vpop.f32.mrb[0].mxu0
    %v509 = vadd.f32 0.0, %v508
    %v510 = vpop.f32.mrb[0].mxu0
    %v511 = vpop.f32.mrb[0].mxu0
    %v512 = vpop.f32.mrb[0].mxu0
    %513 = vdwg.mxu0
    %vm514 = vcmask 130048
    %515 = vst.msk [vmem:[#allocation5] sm:$0xff] %vm514, %v509
    // Predicated region
    $region26: #{tpu_custom_call.1} parent=1 // pred_check
      _
    $region27: #{tpu_custom_call.1} parent=1 // pred_check_branch
      %517 = sbr.rel (0) target = $region29
    $region28: #{tpu_custom_call.1} parent=1 // pred_region
      %s519 = ssub.s32 128, 128
      %520 = vsyncadd [#allocation4], %s519
      %s522 = sshll.u32 [#allocation5], 4
      %s523 = int_to_ptr.vmem [resolvable:$true] %s522
      %525 = dma.vmem_to_hbm [thread:$0]  %s523, 128, %s5, [#allocation4]
    $region29: #{tpu_custom_call.1} parent=1 // pred_fallthru
      _
    // Predicated region
    $region30: #{tpu_custom_call.1} parent=1 // pred_check
      _
    $region31: #{tpu_custom_call.1} parent=1 // pred_check_branch
      %527 = sbr.rel (0) target = $region33
    $region32: #{tpu_custom_call.1} parent=1 // pred_region
      %528 = dma.done [#allocation4], 128
    $region33: #{tpu_custom_call.1} parent=1 // pred_fallthru
      _
    %529 = vsyncpa [#allocation3], 1
    %530 = vsyncpa [#allocation4], 1

</llo_original>
